<compile_context>
chip_gen: v5e
topology: v5e:2x2
jax: 0.10.0
libtpu: 0.0.40
codegen_flags: <defaults>
</compile_context>

<pallas_src>
import jax
import jax.numpy as jnp
from jax.experimental import pallas as pl
from jax.experimental.pallas import tpu as pltpu

NEG_INF_BIAS = -1e30  # additive mask value for non-edges (finite on purpose)


def _round_up(x, m):
    return ((x + m - 1) // m) * m


# ----------------------------------------------------------------------------
# Kernel 1: fused projection  z_aug = h @ [W | W a_l | W a_r | 0...]
# ----------------------------------------------------------------------------
def project_kernel(h_ref, w_ref, zaug_ref):
    zaug_ref[...] = jnp.dot(h_ref[...], w_ref[...],
                            preferred_element_type=jnp.float32)


# ----------------------------------------------------------------------------
# Kernel 2: tiled online-softmax attention + aggregation
#   grid = (num_dst_blocks ["parallel"], num_src_blocks ["arbitrary"])
# ----------------------------------------------------------------------------
def gat_attn_kernel(sdst_ref, ssrc_ref, bias_ref, z_ref, out_ref,
                    m_ref, l_ref, acc_ref):
    ki = pl.program_id(1)

    @pl.when(ki == 0)
    def _init():
        m_ref[...] = jnp.full_like(m_ref, -jnp.inf)
        l_ref[...] = jnp.zeros_like(l_ref)
        acc_ref[...] = jnp.zeros_like(acc_ref)

    # e[i, j] = leaky_relu(s_dst[i] + s_src[j]) + bias[i, j]
    e = sdst_ref[...] + ssrc_ref[...]                     # (T,1)+(1,T) -> (T,T)
    e = jnp.where(e > 0, e, 0.01 * e)                     # leaky_relu (slope .01)
    e = e + bias_ref[...].astype(jnp.float32)             # additive edge mask

    m_prev = m_ref[...]
    m_new = jnp.maximum(m_prev, jnp.max(e, axis=-1, keepdims=True))
    corr = jnp.exp(m_prev - m_new)
    p = jnp.exp(e - m_new)                                # (T, T)

    l_ref[...] = corr * l_ref[...] + jnp.sum(p, axis=-1, keepdims=True)
    acc_ref[...] = corr * acc_ref[...] + jnp.dot(
        p.astype(jnp.bfloat16), z_ref[...],
        preferred_element_type=jnp.float32)
    m_ref[...] = m_new

    @pl.when(ki == pl.num_programs(1) - 1)
    def _finalize():
        out_ref[...] = acc_ref[...] * pl.reciprocal(l_ref[...], approx=True)


# ----------------------------------------------------------------------------
# Wrapper
# ----------------------------------------------------------------------------
def gat_forward(h, w_fc, attn_w, adj):
    """h: (N, in_dim); w_fc: (out_dim, in_dim) torch Linear weight (no bias);
    attn_w: (1, 2*out_dim) attention weight; adj: (N, N), adj[dst, src] != 0
    for edge src->dst.  Returns (N, out_dim)."""
    f32 = jnp.float32
    N, in_dim = h.shape
    out_dim = w_fc.shape[0]

    # --- tiling / padding: lane-dense, (8,128)-aligned, sized for 64 MiB VMEM
    T = min(512, _round_up(max(N, 1), 128))     # square (dst, src) tile
    N_pad = _round_up(N, T)
    D_pad = _round_up(out_dim, 128)             # lane-dense feature axis
    D_aug = D_pad + 128                         # extra lane block for a_l/a_r cols

    h_pad = jnp.zeros((N_pad, in_dim), f32).at[:N, :].set(h.astype(f32))

    w_t = w_fc.T.astype(f32)                    # (in_dim, out_dim)
    a_l = attn_w[0, :out_dim].astype(f32)
    a_r = attn_w[0, out_dim:].astype(f32)
    w_aug = jnp.zeros((in_dim, D_aug), f32)
    w_aug = w_aug.at[:, :out_dim].set(w_t)              # z columns
    w_aug = w_aug.at[:, D_pad].set(w_t @ a_l)           # s_src = a_l . z
    w_aug = w_aug.at[:, D_pad + 1].set(w_t @ a_r)       # s_dst = a_r . z

    # --- kernel 1: projection (one MXU matmul per row block) ----------------
    z_aug = pl.pallas_call(
        project_kernel,
        out_shape=jax.ShapeDtypeStruct((N_pad, D_aug), f32),
        grid_spec=pltpu.PrefetchScalarGridSpec(
            num_scalar_prefetch=0,
            grid=(N_pad // T,),
            in_specs=[
                pl.BlockSpec((T, in_dim), lambda i: (i, 0)),
                pl.BlockSpec((in_dim, D_aug), lambda i: (0, 0)),
            ],
            out_specs=pl.BlockSpec((T, D_aug), lambda i: (i, 0)),
        ),
        compiler_params=pltpu.CompilerParams(
            dimension_semantics=("parallel",),
            vmem_limit_bytes=32 << 20),
    )(h_pad, w_aug)

    z_bf16 = z_aug[:, :D_pad].astype(jnp.bfloat16)   # (N_pad, D_pad) src features
    s_src_row = z_aug[:, D_pad][None, :]             # (1, N_pad) f32, lane-aligned
    s_dst_col = z_aug[:, D_pad + 1][:, None]         # (N_pad, 1) f32

    # --- adjacency as bf16 additive bias (0 on edge, -1e30 off edge) --------
    adj_pad = jnp.zeros((N_pad, N_pad), f32).at[:N, :N].set(adj.astype(f32))
    bias = jnp.where(adj_pad > 0, 0.0, NEG_INF_BIAS).astype(jnp.bfloat16)

    # --- kernel 2: tiled flash-style attention -------------------------------
    num_q = N_pad // T
    num_k = N_pad // T
    out_pad = pl.pallas_call(
        gat_attn_kernel,
        out_shape=jax.ShapeDtypeStruct((N_pad, D_pad), f32),
        grid_spec=pltpu.PrefetchScalarGridSpec(
            num_scalar_prefetch=0,
            grid=(num_q, num_k),
            in_specs=[
                pl.BlockSpec((T, 1), lambda qi, ki: (qi, 0)),      # s_dst (col)
                pl.BlockSpec((1, T), lambda qi, ki: (0, ki)),      # s_src (row)
                pl.BlockSpec((T, T), lambda qi, ki: (qi, ki)),     # adj bias bf16
                pl.BlockSpec((T, D_pad), lambda qi, ki: (ki, 0)),  # z (src) bf16
            ],
            out_specs=pl.BlockSpec((T, D_pad), lambda qi, ki: (qi, 0)),
            scratch_shapes=[
                pltpu.VMEM((T, 1), jnp.float32),       # running max m
                pltpu.VMEM((T, 1), jnp.float32),       # running sum l
                pltpu.VMEM((T, D_pad), jnp.float32),   # f32 accumulator
            ],
        ),
        compiler_params=pltpu.CompilerParams(
            dimension_semantics=("parallel", "arbitrary"),
            vmem_limit_bytes=32 << 20),
    )(s_dst_col, s_src_row, bias, z_bf16)

    return out_pad[:N, :out_dim]


# ----------------------------------------------------------------------------
# Pure-JAX reference of the same forward pass
# ----------------------------------------------------------------------------
def _reference(h, w_fc, attn_w, adj):
    out_dim = w_fc.shape[0]
    z = h @ w_fc.T
    a_l = attn_w[0, :out_dim]
    a_r = attn_w[0, out_dim:]
    s_src = z @ a_l
    s_dst = z @ a_r
    e = s_dst[:, None] + s_src[None, :]
    e = jnp.where(e > 0, e, 0.01 * e)
    masked = jnp.where(adj > 0, e, NEG_INF_BIAS)
    alpha = jax.nn.softmax(masked, axis=-1)
    return alpha @ z


if __name__ == "__main__":
    key = jax.random.PRNGKey(0)
    N, in_dim, out_dim = 16, 8, 32
    k_h, k_fc, k_attn, k_adj = jax.random.split(key, 4)

    # deterministic xavier_normal_ init with gain = calculate_gain('relu') = sqrt(2)
    gain = jnp.sqrt(2.0)
    std_fc = gain * jnp.sqrt(2.0 / (in_dim + out_dim))
    std_attn = gain * jnp.sqrt(2.0 / (2 * out_dim + 1))

    h = jax.random.normal(k_h, (N, in_dim), dtype=jnp.float32)
    w_fc = std_fc * jax.random.normal(k_fc, (out_dim, in_dim), dtype=jnp.float32)
    attn_w = std_attn * jax.random.normal(k_attn, (1, 2 * out_dim), dtype=jnp.float32)

    # graph 1: fully connected with self-loops (the original synthetic test)
    adj_full = jnp.ones((N, N), dtype=jnp.float32)
    # graph 2: random sparse graph with guaranteed self-loops (exercises the mask)
    adj_rand = (jax.random.uniform(k_adj, (N, N)) < 0.4).astype(jnp.float32)
    adj_rand = jnp.maximum(adj_rand, jnp.eye(N, dtype=jnp.float32))

    for adj in (adj_full, adj_rand):
        out = jax.block_until_ready(gat_forward(h, w_fc, attn_w, adj))
        ref = _reference(h, w_fc, attn_w, adj)
        assert out.shape == (N, out_dim)
        # tolerance accounts for bf16 MXU operands (z, p) with f32 accumulation
        assert jnp.allclose(out, ref, atol=2e-2, rtol=2e-2), \
            float(jnp.max(jnp.abs(out - ref)))

    print("KERNEL_OK")
</pallas_src>

<mosaic_0001>
module attributes {stable_mosaic.version = 11 : i64} {
  func.func @project_kernel(%arg0: i32, %arg1: memref<128x8xf32, #tpu.memory_space<vmem>>, %arg2: memref<8x256xf32, #tpu.memory_space<vmem>>, %arg3: memref<128x256xf32, #tpu.memory_space<vmem>>) attributes {dimension_semantics = [#tpu.dimension_semantics<parallel>], iteration_bounds = array<i64: 1>, scalar_prefetch = 0 : i64, scratch_operands = 0 : i64, tpu.core_type = #tpu.core_type<tc>, window_params = [{transform_indices = @transform_0, window_bounds = array<i64: 128, 8>}, {pipeline_mode = #tpu.pipeline_mode<synchronous>, transform_indices = @transform_1, window_bounds = array<i64: 8, 256>}, {transform_indices = @transform_2, window_bounds = array<i64: 128, 256>}]} {
    %c0 = arith.constant 0 : index
    %c0_0 = arith.constant 0 : index
    %0 = vector.load %arg1[%c0, %c0_0] : memref<128x8xf32, #tpu.memory_space<vmem>>, vector<128x8xf32>
    %c0_1 = arith.constant 0 : index
    %c0_2 = arith.constant 0 : index
    %1 = vector.load %arg2[%c0_1, %c0_2] : memref<8x256xf32, #tpu.memory_space<vmem>>, vector<8x256xf32>
    %cst = arith.constant dense<0.000000e+00> : vector<128x256xf32>
    %2 = tpu.matmul %0, %1, %cst {dimension_numbers = #tpu.dot_dimension_numbers<[1], [0], [0], [1], [0, 0, 1, 1], [], []>} : vector<128x8xf32>, vector<8x256xf32>, vector<128x256xf32> -> vector<128x256xf32>
    %c0_3 = arith.constant 0 : index
    %c0_4 = arith.constant 0 : index
    %3 = vector.load %arg3[%c0_3, %c0_4] : memref<128x256xf32, #tpu.memory_space<vmem>>, vector<128x256xf32>
    tpu.vector_store %arg3[%c0_3, %c0_4], %2 {strides = array<i32>} : memref<128x256xf32, #tpu.memory_space<vmem>>, vector<128x256xf32>,
    return
  }
  func.func @transform_0(%arg0: i32) -> (i32, i32) {
    %c0_i32 = arith.constant 0 : i32
    %c0_i32_0 = arith.constant 0 : i32
    return %arg0, %c0_i32 : i32, i32
  }
  func.func @transform_1(%arg0: i32) -> (i32, i32) {
    %c0_i32 = arith.constant 0 : i32
    %c0_i32_0 = arith.constant 0 : i32
    %c0_i32_1 = arith.constant 0 : i32
    return %c0_i32, %c0_i32_0 : i32, i32
  }
  func.func @transform_2(%arg0: i32) -> (i32, i32) {
    %c0_i32 = arith.constant 0 : i32
    %c0_i32_0 = arith.constant 0 : i32
    return %arg0, %c0_i32 : i32, i32
  }
}

</mosaic_0001>

<llo_original>
// kernel: tpu_custom_call.1
$region0: #{tpu_custom_call.1}
  #allocation0 [shape = 'u32[]', space=smem, size = 0x4, offset = 0x4, fixed_abs, tag = 'smem constant byte address 0x4 - core index']
  #allocation1 [shape = 'u32[72,128]{1,0:T(1,128)}', space=vmem, size = 0x9000, scoped, tag = 'internal scratch']
  %s0 = inlined_call_operand.vmem [shape: f32[128,8], index: 0, kind: input, shape index: {}]
  %s1 = inlined_call_operand.vmem [shape: f32[8,256], index: 1, kind: input, shape index: {}]
  %s2 = inlined_call_operand.hbm [shape: f32[128,256], index: 2, kind: output, shape index: {}]
  %s3 = sld [smem:[#allocation0]]
  $region18: #{tpu_custom_call.1} parent=0
    _
  %s5 = ssub.s32 1, %s3
  %s6 = scalar_select 0, %s5, %s3
  $region1: #{tpu_custom_call.1} parent=0
    #allocation2 [shape = 'u8[131072]{0}', space=vmem, size = 0x20000, scoped, tag = 'output window, operand 0, single buffered']
    #allocation3 [shape = 's32[1]{0}', space=sflag, size = 0x4, scoped, tag = 'scoped memory for tpu_custom_call.1']
    %7 = vsyncpa [#allocation3], 0
    // Predicated region
    $region2: #{tpu_custom_call.1} parent=1 // pred_check
      _
    $region3: #{tpu_custom_call.1} parent=1 // pred_check_branch
      %9 = sbr.rel (0) target = $region5
    $region4: #{tpu_custom_call.1} parent=1 // pred_region
      _
    $region5: #{tpu_custom_call.1} parent=1 // pred_fallthru
      _
    // Predicated region
    $region6: #{tpu_custom_call.1} parent=1 // pred_check
      _
    $region7: #{tpu_custom_call.1} parent=1 // pred_check_branch
      %11 = sbr.rel (0) target = $region9
    $region8: #{tpu_custom_call.1} parent=1 // pred_region
      _
    $region9: #{tpu_custom_call.1} parent=1 // pred_fallthru
      _
    %v12 = vld [vmem:[%s0] sm:$0xff]
    %v13 = vld [vmem:[%s0 + $0x8] sm:$0xff]
    %v14 = vld [vmem:[%s0 + $0x10] sm:$0xff]
    %v15 = vld [vmem:[%s0 + $0x18] sm:$0xff]
    %v16 = vld [vmem:[%s0 + $0x20] sm:$0xff]
    %v17 = vld [vmem:[%s0 + $0x28] sm:$0xff]
    %v18 = vld [vmem:[%s0 + $0x30] sm:$0xff]
    %v19 = vld [vmem:[%s0 + $0x38] sm:$0xff]
    %v20 = vld [vmem:[%s0 + $0x40] sm:$0xff]
    %v21 = vld [vmem:[%s0 + $0x48] sm:$0xff]
    %v22 = vld [vmem:[%s0 + $0x50] sm:$0xff]
    %v23 = vld [vmem:[%s0 + $0x58] sm:$0xff]
    %v24 = vld [vmem:[%s0 + $0x60] sm:$0xff]
    %v25 = vld [vmem:[%s0 + $0x68] sm:$0xff]
    %v26 = vld [vmem:[%s0 + $0x70] sm:$0xff]
    %v27 = vld [vmem:[%s0 + $0x78] sm:$0xff]
    %v28 = vld [vmem:[%s1] sm:$0xff]
    %v29 = vld [vmem:[%s1 + $0x8] sm:$0xff]
    %vm30 = vcmask 64512
    %v32 = vsel %vm30, %v12, 0
    %v35 = vsel %vm30, %v13, 0
    %v38 = vsel %vm30, %v14, 0
    %v41 = vsel %vm30, %v15, 0
    %v44 = vsel %vm30, %v16, 0
    %v47 = vsel %vm30, %v17, 0
    %v50 = vsel %vm30, %v18, 0
    %v53 = vsel %vm30, %v19, 0
    %v56 = vsel %vm30, %v20, 0
    %v59 = vsel %vm30, %v21, 0
    %v62 = vsel %vm30, %v22, 0
    %v65 = vsel %vm30, %v23, 0
    %v68 = vsel %vm30, %v24, 0
    %v71 = vsel %vm30, %v25, 0
    %v74 = vsel %vm30, %v26, 0
    %v77 = vsel %vm30, %v27, 0
    %79 = vmatpush.msra.mxu0 0.0
    %80 = vmatpush.msra.mxu0 0.0
    %81 = vmatpush.msra.mxu0 0.0
    %82 = vmatpush.msra.mxu0 0.0
    %83 = vmatpush.msra.mxu0 0.0
    %84 = vmatpush.msra.mxu0 0.0
    %85 = vmatpush.msra.mxu0 0.0
    %86 = vmatpush.msra.mxu0 0.0
    %87 = vmatpush.msra.mxu0 0.0
    %88 = vmatpush.msra.mxu0 0.0
    %89 = vmatpush.msra.mxu0 0.0
    %90 = vmatpush.msra.mxu0 0.0
    %91 = vmatpush.msra.mxu0 0.0
    %92 = vmatpush.msra.mxu0 0.0
    %93 = vmatpush.msra.mxu0 0.0
    %94 = vmatpush.msra.mxu0 %v28
    %95 = vmatmul.f32.gmra.mxu0 %v32
    %v96 = vpop.f32.mrf.mxu0
    %v97 = vadd.f32 0.0, %v96
    %98 = vmatmul.f32.gmra.mxu0 %v35
    %v99 = vpop.f32.mrf.mxu0
    %v100 = vadd.f32 0.0, %v99
    %101 = vmatmul.f32.gmra.mxu0 %v38
    %v102 = vpop.f32.mrf.mxu0
    %v103 = vadd.f32 0.0, %v102
    %104 = vmatmul.f32.gmra.mxu0 %v41
    %v105 = vpop.f32.mrf.mxu0
    %v106 = vadd.f32 0.0, %v105
    %107 = vmatmul.f32.gmra.mxu0 %v44
    %v108 = vpop.f32.mrf.mxu0
    %v109 = vadd.f32 0.0, %v108
    %110 = vmatmul.f32.gmra.mxu0 %v47
    %v111 = vpop.f32.mrf.mxu0
    %v112 = vadd.f32 0.0, %v111
    %113 = vmatmul.f32.gmra.mxu0 %v50
    %v114 = vpop.f32.mrf.mxu0
    %v115 = vadd.f32 0.0, %v114
    %116 = vmatmul.f32.gmra.mxu0 %v53
    %v117 = vpop.f32.mrf.mxu0
    %v118 = vadd.f32 0.0, %v117
    %119 = vmatmul.f32.gmra.mxu0 %v56
    %v120 = vpop.f32.mrf.mxu0
    %v121 = vadd.f32 0.0, %v120
    %122 = vmatmul.f32.gmra.mxu0 %v59
    %v123 = vpop.f32.mrf.mxu0
    %v124 = vadd.f32 0.0, %v123
    %125 = vmatmul.f32.gmra.mxu0 %v62
    %v126 = vpop.f32.mrf.mxu0
    %v127 = vadd.f32 0.0, %v126
    %128 = vmatmul.f32.gmra.mxu0 %v65
    %v129 = vpop.f32.mrf.mxu0
    %v130 = vadd.f32 0.0, %v129
    %131 = vmatmul.f32.gmra.mxu0 %v68
    %v132 = vpop.f32.mrf.mxu0
    %v133 = vadd.f32 0.0, %v132
    %134 = vmatmul.f32.gmra.mxu0 %v71
    %v135 = vpop.f32.mrf.mxu0
    %v136 = vadd.f32 0.0, %v135
    %137 = vmatmul.f32.gmra.mxu0 %v74
    %v138 = vpop.f32.mrf.mxu0
    %v139 = vadd.f32 0.0, %v138
    %140 = vmatmul.f32.gmra.mxu0 %v77
    %v141 = vpop.f32.mrf.mxu0
    %v142 = vadd.f32 0.0, %v141
    %143 = vdwg.mxu0
    %144 = vmatpush.msra.mxu0 0.0
    %145 = vmatpush.msra.mxu0 0.0
    %146 = vmatpush.msra.mxu0 0.0
    %147 = vmatpush.msra.mxu0 0.0
    %148 = vmatpush.msra.mxu0 0.0
    %149 = vmatpush.msra.mxu0 0.0
    %150 = vmatpush.msra.mxu0 0.0
    %151 = vmatpush.msra.mxu0 0.0
    %152 = vmatpush.msra.mxu0 0.0
    %153 = vmatpush.msra.mxu0 0.0
    %154 = vmatpush.msra.mxu0 0.0
    %155 = vmatpush.msra.mxu0 0.0
    %156 = vmatpush.msra.mxu0 0.0
    %157 = vmatpush.msra.mxu0 0.0
    %158 = vmatpush.msra.mxu0 0.0
    %159 = vmatpush.msra.mxu0 %v29
    %160 = vmatmul.f32.gmra.mxu0 %v32
    %v161 = vpop.f32.mrf.mxu0
    %v162 = vadd.f32 0.0, %v161
    %163 = vmatmul.f32.gmra.mxu0 %v35
    %v164 = vpop.f32.mrf.mxu0
    %v165 = vadd.f32 0.0, %v164
    %166 = vmatmul.f32.gmra.mxu0 %v38
    %v167 = vpop.f32.mrf.mxu0
    %v168 = vadd.f32 0.0, %v167
    %169 = vmatmul.f32.gmra.mxu0 %v41
    %v170 = vpop.f32.mrf.mxu0
    %v171 = vadd.f32 0.0, %v170
    %172 = vmatmul.f32.gmra.mxu0 %v44
    %v173 = vpop.f32.mrf.mxu0
    %v174 = vadd.f32 0.0, %v173
    %175 = vmatmul.f32.gmra.mxu0 %v47
    %v176 = vpop.f32.mrf.mxu0
    %v177 = vadd.f32 0.0, %v176
    %178 = vmatmul.f32.gmra.mxu0 %v50
    %v179 = vpop.f32.mrf.mxu0
    %v180 = vadd.f32 0.0, %v179
    %181 = vmatmul.f32.gmra.mxu0 %v53
    %v182 = vpop.f32.mrf.mxu0
    %v183 = vadd.f32 0.0, %v182
    %184 = vmatmul.f32.gmra.mxu0 %v56
    %v185 = vpop.f32.mrf.mxu0
    %v186 = vadd.f32 0.0, %v185
    %187 = vmatmul.f32.gmra.mxu0 %v59
    %v188 = vpop.f32.mrf.mxu0
    %v189 = vadd.f32 0.0, %v188
    %190 = vmatmul.f32.gmra.mxu0 %v62
    %v191 = vpop.f32.mrf.mxu0
    %v192 = vadd.f32 0.0, %v191
    %193 = vmatmul.f32.gmra.mxu0 %v65
    %v194 = vpop.f32.mrf.mxu0
    %v195 = vadd.f32 0.0, %v194
    %196 = vmatmul.f32.gmra.mxu0 %v68
    %v197 = vpop.f32.mrf.mxu0
    %v198 = vadd.f32 0.0, %v197
    %199 = vmatmul.f32.gmra.mxu0 %v71
    %v200 = vpop.f32.mrf.mxu0
    %v201 = vadd.f32 0.0, %v200
    %202 = vmatmul.f32.gmra.mxu0 %v74
    %v203 = vpop.f32.mrf.mxu0
    %v204 = vadd.f32 0.0, %v203
    %205 = vmatmul.f32.gmra.mxu0 %v77
    %v206 = vpop.f32.mrf.mxu0
    %v207 = vadd.f32 0.0, %v206
    %208 = vdwg.mxu0
    %209 = vst [vmem:[#allocation2] sm:$0xff] %v97
    %210 = vst [vmem:[#allocation2 + $0x8] sm:$0xff] %v162
    %211 = vst [vmem:[#allocation2 + $0x10] sm:$0xff] %v100
    %212 = vst [vmem:[#allocation2 + $0x18] sm:$0xff] %v165
    %213 = vst [vmem:[#allocation2 + $0x20] sm:$0xff] %v103
    %214 = vst [vmem:[#allocation2 + $0x28] sm:$0xff] %v168
    %215 = vst [vmem:[#allocation2 + $0x30] sm:$0xff] %v106
    %216 = vst [vmem:[#allocation2 + $0x38] sm:$0xff] %v171
    %217 = vst [vmem:[#allocation2 + $0x40] sm:$0xff] %v109
    %218 = vst [vmem:[#allocation2 + $0x48] sm:$0xff] %v174
    %219 = vst [vmem:[#allocation2 + $0x50] sm:$0xff] %v112
    %220 = vst [vmem:[#allocation2 + $0x58] sm:$0xff] %v177
    %221 = vst [vmem:[#allocation2 + $0x60] sm:$0xff] %v115
    %222 = vst [vmem:[#allocation2 + $0x68] sm:$0xff] %v180
    %223 = vst [vmem:[#allocation2 + $0x70] sm:$0xff] %v118
    %224 = vst [vmem:[#allocation2 + $0x78] sm:$0xff] %v183
    %225 = vst [vmem:[#allocation2 + $0x80] sm:$0xff] %v121
    %226 = vst [vmem:[#allocation2 + $0x88] sm:$0xff] %v186
    %227 = vst [vmem:[#allocation2 + $0x90] sm:$0xff] %v124
    %228 = vst [vmem:[#allocation2 + $0x98] sm:$0xff] %v189
    %229 = vst [vmem:[#allocation2 + $0xa0] sm:$0xff] %v127
    %230 = vst [vmem:[#allocation2 + $0xa8] sm:$0xff] %v192
    %231 = vst [vmem:[#allocation2 + $0xb0] sm:$0xff] %v130
    %232 = vst [vmem:[#allocation2 + $0xb8] sm:$0xff] %v195
    %233 = vst [vmem:[#allocation2 + $0xc0] sm:$0xff] %v133
    %234 = vst [vmem:[#allocation2 + $0xc8] sm:$0xff] %v198
    %235 = vst [vmem:[#allocation2 + $0xd0] sm:$0xff] %v136
    %236 = vst [vmem:[#allocation2 + $0xd8] sm:$0xff] %v201
    %237 = vst [vmem:[#allocation2 + $0xe0] sm:$0xff] %v139
    %238 = vst [vmem:[#allocation2 + $0xe8] sm:$0xff] %v204
    %239 = vst [vmem:[#allocation2 + $0xf0] sm:$0xff] %v142
    %240 = vst [vmem:[#allocation2 + $0xf8] sm:$0xff] %v207
    // Predicated region
    $region10: #{tpu_custom_call.1} parent=1 // pred_check
      _
    $region11: #{tpu_custom_call.1} parent=1 // pred_check_branch
      %242 = sbr.rel (0) target = $region13
    $region12: #{tpu_custom_call.1} parent=1 // pred_region
      %244 = vsyncadd [#allocation3], 0
      %s245 = sshll.u32 [#allocation2], 4
      %s246 = int_to_ptr.vmem [resolvable:$true] %s245
      %s247 = sshll.u32 %s2, 4
      %s248 = int_to_ptr.hbm [resolvable:$true] %s247
      %253 = dma.vmem_to_hbm [thread:$0]  %s246, 4096, %s248, [#allocation3], 256, 256, 16
    $region13: #{tpu_custom_call.1} parent=1 // pred_fallthru
      _
    // Predicated region
    $region14: #{tpu_custom_call.1} parent=1 // pred_check
      _
    $region15: #{tpu_custom_call.1} parent=1 // pred_check_branch
      %255 = sbr.rel (0) target = $region17
    $region16: #{tpu_custom_call.1} parent=1 // pred_region
      %257 = dma.done [#allocation3], 4096
    $region17: #{tpu_custom_call.1} parent=1 // pred_fallthru
      _
    %258 = vsyncpa [#allocation3], 1

</llo_original>
